<compile_context>
chip_gen: v5e
topology: v5e:2x2
jax: 0.10.0
libtpu: 0.0.40
codegen_flags: <defaults>
</compile_context>

<pallas_src>
import functools

import jax
import jax.numpy as jnp
from jax.experimental import pallas as pl
from jax.experimental.pallas import tpu as pltpu

OUT_PAD = 128  # Linear output (size 1) padded to a full 128-lane tile.


def pcritic_kernel(z_ref, c_ref, wg_ref, bg_ref, wo_ref, bo_ref, out_ref):
    H = c_ref.shape[1]
    z = z_ref[...]          # (B_pad, in + H)  = [x | h]
    c = c_ref[...]          # (B_pad, H)

    # Single fused gate pre-activation: one (B, in+H) @ (in+H, 4H) MXU push.
    gates = (
        jnp.dot(z, wg_ref[...], preferred_element_type=jnp.float32)
        + bg_ref[...]
    )

    # PyTorch LSTMCell gate order: i, f, g, o.
    i_g = jax.nn.sigmoid(gates[:, 0:H])
    f_g = jax.nn.sigmoid(gates[:, H:2 * H])
    g_g = jnp.tanh(gates[:, 2 * H:3 * H])
    o_g = jax.nn.sigmoid(gates[:, 3 * H:4 * H])

    c_new = f_g * c + i_g * g_g
    h_new = o_g * jnp.tanh(c_new)

    # Output head: real weight lives in lane 0 of the 128-lane-padded W_out / b_out
    # (pad lanes are zero -> tanh(0)=0 there).
    out_pad = jnp.tanh(
        jnp.dot(h_new, wo_ref[...], preferred_element_type=jnp.float32)
        + bo_ref[...]
    )

    # Single lane-dense output slab: [out_pad(128) | h_new(H) | c_new(H)].
    out_ref[:, 0:OUT_PAD] = out_pad
    out_ref[:, OUT_PAD:OUT_PAD + H] = h_new
    out_ref[:, OUT_PAD + H:OUT_PAD + 2 * H] = c_new


def pcritic_forward(state, action, hidden_state, cell_state, packed):
    """state/action: lists of (B, *) arrays; hidden/cell: (B, H).
    Returns (out (B,1), h_new (B,H), c_new (B,H)) — same semantics as PCritic.forward."""
    x = jnp.concatenate(list(state) + list(action), axis=1)
    h = hidden_state
    c = cell_state
    B = x.shape[0]
    H = h.shape[1]

    # Pack activations: z = [x | h]; pad batch up to a full 8-row sublane group.
    z = jnp.concatenate([x, h], axis=1)
    b_pad = max(8, ((B + 7) // 8) * 8)
    if b_pad != B:
        z = jnp.pad(z, ((0, b_pad - B), (0, 0)))
        c = jnp.pad(c, ((0, b_pad - B), (0, 0)))

    slab_w = OUT_PAD + 2 * H
    vmem = pl.BlockSpec(memory_space=pltpu.VMEM)
    slab = pl.pallas_call(
        pcritic_kernel,
        out_shape=jax.ShapeDtypeStruct((b_pad, slab_w), jnp.float32),
        in_specs=[vmem] * 6,
        out_specs=vmem,
    )(z, c, packed["w_gate"], packed["b_gate"], packed["w_out"], packed["b_out"])

    out = slab[:B, 0:1]
    h_new = slab[:B, OUT_PAD:OUT_PAD + H]
    c_new = slab[:B, OUT_PAD + H:OUT_PAD + 2 * H]
    return out, h_new, c_new


pcritic_forward_jit = jax.jit(pcritic_forward)


def init_raw_params(key, input_size, hidden):
    """PyTorch-layout LSTMCell + Linear params, uniform(-1/sqrt(hidden), 1/sqrt(hidden))."""
    bound = 1.0 / float(jnp.sqrt(jnp.float32(hidden)))
    keys = jax.random.split(key, 6)
    u = lambda k, shape: jax.random.uniform(k, shape, jnp.float32, -bound, bound)
    return {
        "w_ih": u(keys[0], (4 * hidden, input_size)),  # gate order i,f,g,o
        "w_hh": u(keys[1], (4 * hidden, hidden)),
        "b_ih": u(keys[2], (4 * hidden,)),
        "b_hh": u(keys[3], (4 * hidden,)),
        "w_out": u(keys[4], (1, hidden)),
        "b_out": u(keys[5], (1,)),
    }


def pack_params(raw):
    """Pack PyTorch-layout params into the fused, kernel-friendly layout."""
    hidden = raw["w_hh"].shape[1]
    w_gate = jnp.concatenate([raw["w_ih"].T, raw["w_hh"].T], axis=0)      # (in+H, 4H)
    b_gate = (raw["b_ih"] + raw["b_hh"]).reshape(1, -1)                   # (1, 4H)
    w_out = jnp.zeros((hidden, OUT_PAD), jnp.float32).at[:, 0:1].set(raw["w_out"].T)
    b_out = jnp.zeros((1, OUT_PAD), jnp.float32).at[0, 0].set(raw["b_out"][0])
    return {"w_gate": w_gate, "b_gate": b_gate, "w_out": w_out, "b_out": b_out}


def ref_forward(state, action, h, c, raw):
    """Pure-JAX reference with PyTorch LSTMCell + Linear + tanh semantics."""
    hp = jax.lax.Precision.HIGHEST
    x = jnp.concatenate(list(state) + list(action), axis=1)
    H = h.shape[1]
    gates = (
        jnp.dot(x, raw["w_ih"].T, precision=hp) + raw["b_ih"]
        + jnp.dot(h, raw["w_hh"].T, precision=hp) + raw["b_hh"]
    )
    i = jax.nn.sigmoid(gates[:, 0:H])
    f = jax.nn.sigmoid(gates[:, H:2 * H])
    g = jnp.tanh(gates[:, 2 * H:3 * H])
    o = jax.nn.sigmoid(gates[:, 3 * H:4 * H])
    c_new = f * c + i * g
    h_new = o * jnp.tanh(c_new)
    out = jnp.tanh(jnp.dot(h_new, raw["w_out"].T, precision=hp) + raw["b_out"])
    return out, h_new, c_new


if __name__ == "__main__":
    # Small shapes consistent with PCritic: 2 agents, obs_shape=[12,12], action_shape=[4,4]
    # -> input_size = 24 + 8 = 32, hidden = 64, output = 1, batch = 2.
    B, HIDDEN = 2, 64
    OBS_SHAPES = (12, 12)
    ACT_SHAPES = (4, 4)
    INPUT = sum(OBS_SHAPES) + sum(ACT_SHAPES)

    root = jax.random.PRNGKey(0)
    k_s0, k_s1, k_a0, k_a1, k_h, k_c, k_p = jax.random.split(root, 7)
    state = [
        jax.random.normal(k_s0, (B, OBS_SHAPES[0]), jnp.float32),
        jax.random.normal(k_s1, (B, OBS_SHAPES[1]), jnp.float32),
    ]
    action = [
        jax.random.normal(k_a0, (B, ACT_SHAPES[0]), jnp.float32),
        jax.random.normal(k_a1, (B, ACT_SHAPES[1]), jnp.float32),
    ]
    h0 = jax.random.normal(k_h, (B, HIDDEN), jnp.float32)
    c0 = jax.random.normal(k_c, (B, HIDDEN), jnp.float32)

    raw = init_raw_params(k_p, INPUT, HIDDEN)
    packed = pack_params(raw)

    out, h1, c1 = pcritic_forward_jit(state, action, h0, c0, packed)
    jax.block_until_ready((out, h1, c1))

    r_out, r_h, r_c = ref_forward(state, action, h0, c0, raw)
    assert out.shape == (B, 1), f"bad out shape {out.shape}"
    assert jnp.allclose(out, r_out, atol=1e-5, rtol=1e-5), "output mismatch"
    assert jnp.allclose(h1, r_h, atol=1e-5, rtol=1e-5), "hidden mismatch"
    assert jnp.allclose(c1, r_c, atol=1e-5, rtol=1e-5), "cell mismatch"

    print("KERNEL_OK")
</pallas_src>

<mosaic_0001>
module attributes {stable_mosaic.version = 11 : i64} {
  func.func @pcritic_kernel(%arg0: memref<8x96xf32, #tpu.memory_space<vmem>>, %arg1: memref<8x64xf32, #tpu.memory_space<vmem>>, %arg2: memref<96x256xf32, #tpu.memory_space<vmem>>, %arg3: memref<1x256xf32, #tpu.memory_space<vmem>>, %arg4: memref<64x128xf32, #tpu.memory_space<vmem>>, %arg5: memref<1x128xf32, #tpu.memory_space<vmem>>, %arg6: memref<8x256xf32, #tpu.memory_space<vmem>>) attributes {dimension_semantics = [], scalar_prefetch = 0 : i64, scratch_operands = 0 : i64, tpu.core_type = #tpu.core_type<tc>} {
    %c0 = arith.constant 0 : index
    %c0_0 = arith.constant 0 : index
    %0 = vector.load %arg0[%c0, %c0_0] : memref<8x96xf32, #tpu.memory_space<vmem>>, vector<8x96xf32>
    %c0_1 = arith.constant 0 : index
    %c0_2 = arith.constant 0 : index
    %1 = vector.load %arg1[%c0_1, %c0_2] : memref<8x64xf32, #tpu.memory_space<vmem>>, vector<8x64xf32>
    %c0_3 = arith.constant 0 : index
    %c0_4 = arith.constant 0 : index
    %2 = vector.load %arg2[%c0_3, %c0_4] : memref<96x256xf32, #tpu.memory_space<vmem>>, vector<96x256xf32>
    %cst = arith.constant dense<0.000000e+00> : vector<8x256xf32>
    %3 = tpu.matmul %0, %2, %cst {dimension_numbers = #tpu.dot_dimension_numbers<[1], [0], [0], [1], [0, 0, 1, 1], [], []>} : vector<8x96xf32>, vector<96x256xf32>, vector<8x256xf32> -> vector<8x256xf32>
    %c0_5 = arith.constant 0 : index
    %c0_6 = arith.constant 0 : index
    %4 = vector.load %arg3[%c0_5, %c0_6] : memref<1x256xf32, #tpu.memory_space<vmem>>, vector<1x256xf32>
    %5 = vector.broadcast %4 : vector<1x256xf32> to vector<8x256xf32>
    %6 = arith.addf %3, %5 : vector<8x256xf32>
    %7 = vector.extract_strided_slice %6 {offsets = [0, 0], sizes = [8, 64], strides = [1, 1]} : vector<8x256xf32> to vector<8x64xf32>
    %8 = arith.negf %7 : vector<8x64xf32>
    %9 = math.exp %8 : vector<8x64xf32>
    %cst_7 = arith.constant 1.000000e+00 : f32
    %10 = vector.broadcast %cst_7 : f32 to vector<8x64xf32>
    %11 = arith.addf %10, %9 : vector<8x64xf32>
    %12 = arith.divf %10, %11 : vector<8x64xf32>
    %13 = vector.extract_strided_slice %6 {offsets = [0, 64], sizes = [8, 64], strides = [1, 1]} : vector<8x256xf32> to vector<8x64xf32>
    %14 = arith.negf %13 : vector<8x64xf32>
    %15 = math.exp %14 : vector<8x64xf32>
    %cst_8 = arith.constant 1.000000e+00 : f32
    %16 = vector.broadcast %cst_8 : f32 to vector<8x64xf32>
    %17 = arith.addf %16, %15 : vector<8x64xf32>
    %18 = arith.divf %16, %17 : vector<8x64xf32>
    %19 = vector.extract_strided_slice %6 {offsets = [0, 128], sizes = [8, 64], strides = [1, 1]} : vector<8x256xf32> to vector<8x64xf32>
    %20 = math.tanh %19 : vector<8x64xf32>
    %21 = vector.extract_strided_slice %6 {offsets = [0, 192], sizes = [8, 64], strides = [1, 1]} : vector<8x256xf32> to vector<8x64xf32>
    %22 = arith.negf %21 : vector<8x64xf32>
    %23 = math.exp %22 : vector<8x64xf32>
    %cst_9 = arith.constant 1.000000e+00 : f32
    %24 = vector.broadcast %cst_9 : f32 to vector<8x64xf32>
    %25 = arith.addf %24, %23 : vector<8x64xf32>
    %26 = arith.divf %24, %25 : vector<8x64xf32>
    %27 = arith.mulf %18, %1 : vector<8x64xf32>
    %28 = arith.mulf %12, %20 : vector<8x64xf32>
    %29 = arith.addf %27, %28 : vector<8x64xf32>
    %30 = math.tanh %29 : vector<8x64xf32>
    %31 = arith.mulf %26, %30 : vector<8x64xf32>
    %c0_10 = arith.constant 0 : index
    %c0_11 = arith.constant 0 : index
    %32 = vector.load %arg4[%c0_10, %c0_11] : memref<64x128xf32, #tpu.memory_space<vmem>>, vector<64x128xf32>
    %cst_12 = arith.constant dense<0.000000e+00> : vector<8x128xf32>
    %33 = tpu.matmul %31, %32, %cst_12 {dimension_numbers = #tpu.dot_dimension_numbers<[1], [0], [0], [1], [0, 0, 1, 1], [], []>} : vector<8x64xf32>, vector<64x128xf32>, vector<8x128xf32> -> vector<8x128xf32>
    %c0_13 = arith.constant 0 : index
    %c0_14 = arith.constant 0 : index
    %34 = vector.load %arg5[%c0_13, %c0_14] : memref<1x128xf32, #tpu.memory_space<vmem>>, vector<1x128xf32>
    %35 = vector.broadcast %34 : vector<1x128xf32> to vector<8x128xf32>
    %36 = arith.addf %33, %35 : vector<8x128xf32>
    %37 = math.tanh %36 : vector<8x128xf32>
    %c0_15 = arith.constant 0 : index
    %c0_16 = arith.constant 0 : index
    %38 = vector.load %arg6[%c0_15, %c0_16] : memref<8x256xf32, #tpu.memory_space<vmem>>, vector<8x128xf32>
    tpu.vector_store %arg6[%c0_15, %c0_16], %37 {strides = array<i32>} : memref<8x256xf32, #tpu.memory_space<vmem>>, vector<8x128xf32>,
    %c0_17 = arith.constant 0 : index
    %c128 = arith.constant 128 : index
    %39 = vector.load %arg6[%c0_17, %c128] : memref<8x256xf32, #tpu.memory_space<vmem>>, vector<8x64xf32>
    tpu.vector_store %arg6[%c0_17, %c128], %31 {strides = array<i32>} : memref<8x256xf32, #tpu.memory_space<vmem>>, vector<8x64xf32>,
    %c0_18 = arith.constant 0 : index
    %c192 = arith.constant 192 : index
    %40 = vector.load %arg6[%c0_18, %c192] : memref<8x256xf32, #tpu.memory_space<vmem>>, vector<8x64xf32>
    tpu.vector_store %arg6[%c0_18, %c192], %29 {strides = array<i32>} : memref<8x256xf32, #tpu.memory_space<vmem>>, vector<8x64xf32>,
    return
  }
}

</mosaic_0001>

<llo_original>
// kernel: pcritic_forward.1
$region0: #{pcritic_forward.1}
  #allocation0 [shape = 'u32[]', space=smem, size = 0x4, offset = 0x4, fixed_abs, tag = 'smem constant byte address 0x4 - core index']
  #allocation1 [shape = 'u32[72,128]{1,0:T(1,128)}', space=vmem, size = 0x9000, scoped, tag = 'internal scratch']
  %s0 = inlined_call_operand.vmem [shape: f32[8,96], index: 0, kind: input, shape index: {}]
  %s1 = inlined_call_operand.vmem [shape: f32[8,64], index: 1, kind: input, shape index: {}]
  %s2 = inlined_call_operand.hbm [shape: f32[96,256], index: 2, kind: input, shape index: {}]
  %s3 = inlined_call_operand.vmem [shape: f32[1,256], index: 3, kind: input, shape index: {}]
  %s4 = inlined_call_operand.hbm [shape: f32[64,128], index: 4, kind: input, shape index: {}]
  %s5 = inlined_call_operand.vmem [shape: f32[1,128], index: 5, kind: input, shape index: {}]
  %s6 = inlined_call_operand.vmem [shape: f32[8,256], index: 6, kind: output, shape index: {}]
  %s7 = sld [smem:[#allocation0]]
  $region42: #{pcritic_forward.1} parent=0
    _
  %s9 = ssub.s32 1, %s7
  %s10 = scalar_select 0, %s9, %s7
  $region1: #{pcritic_forward.1} parent=0
    #allocation2 [shape = 'u8[98304]{0}', space=vmem, size = 0x18000, scoped, tag = 'input window, operand 2, single buffered']
    #allocation3 [shape = 's32[1]{0}', space=sflag, size = 0x4, scoped, tag = 'scoped memory for pcritic_forward.1']
    #allocation4 [shape = 'u8[32768]{0}', space=vmem, size = 0x8000, scoped, tag = 'input window, operand 4, single buffered']
    #allocation5 [shape = 's32[1]{0}', space=sflag, size = 0x4, scoped, tag = 'scoped memory for pcritic_forward.1']
    %11 = vsyncpa [#allocation3], 0
    %12 = vsyncpa [#allocation5], 0
    // Predicated region
    $region2: #{pcritic_forward.1} parent=1 // pred_check
      _
    $region3: #{pcritic_forward.1} parent=1 // pred_check_branch
      %14 = sbr.rel (0) target = $region5
    $region4: #{pcritic_forward.1} parent=1 // pred_region
      _
    $region5: #{pcritic_forward.1} parent=1 // pred_fallthru
      _
    // Predicated region
    $region6: #{pcritic_forward.1} parent=1 // pred_check
      _
    $region7: #{pcritic_forward.1} parent=1 // pred_check_branch
      %16 = sbr.rel (0) target = $region9
    $region8: #{pcritic_forward.1} parent=1 // pred_region
      _
    $region9: #{pcritic_forward.1} parent=1 // pred_fallthru
      _
    // Predicated region
    $region10: #{pcritic_forward.1} parent=1 // pred_check
      _
    $region11: #{pcritic_forward.1} parent=1 // pred_check_branch
      %18 = sbr.rel (0) target = $region13
    $region12: #{pcritic_forward.1} parent=1 // pred_region
      %20 = vsyncadd [#allocation3], 0
      %s21 = sshll.u32 %s2, 4
      %s22 = int_to_ptr.hbm [resolvable:$true] %s21
      %s23 = sshll.u32 [#allocation2], 4
      %s24 = int_to_ptr.vmem [resolvable:$true] %s23
      %29 = dma.hbm_to_vmem [thread:$0]  %s22, 3072, %s24, [#allocation3], 256, 256, 16
    $region13: #{pcritic_forward.1} parent=1 // pred_fallthru
      _
    // Predicated region
    $region14: #{pcritic_forward.1} parent=1 // pred_check
      _
    $region15: #{pcritic_forward.1} parent=1 // pred_check_branch
      %31 = sbr.rel (0) target = $region17
    $region16: #{pcritic_forward.1} parent=1 // pred_region
      _
    $region17: #{pcritic_forward.1} parent=1 // pred_fallthru
      _
    // Predicated region
    $region18: #{pcritic_forward.1} parent=1 // pred_check
      _
    $region19: #{pcritic_forward.1} parent=1 // pred_check_branch
      %33 = sbr.rel (0) target = $region21
    $region20: #{pcritic_forward.1} parent=1 // pred_region
      %35 = vsyncadd [#allocation5], 0
      %s36 = sshll.u32 %s4, 4
      %s37 = int_to_ptr.hbm [resolvable:$true] %s36
      %s38 = sshll.u32 [#allocation4], 4
      %s39 = int_to_ptr.vmem [resolvable:$true] %s38
      %44 = dma.hbm_to_vmem [thread:$0]  %s37, 1024, %s39, [#allocation5], 128, 128, 8
    $region21: #{pcritic_forward.1} parent=1 // pred_fallthru
      _
    // Predicated region
    $region22: #{pcritic_forward.1} parent=1 // pred_check
      _
    $region23: #{pcritic_forward.1} parent=1 // pred_check_branch
      %46 = sbr.rel (0) target = $region25
    $region24: #{pcritic_forward.1} parent=1 // pred_region
      _
    $region25: #{pcritic_forward.1} parent=1 // pred_fallthru
      _
    // Predicated region
    $region26: #{pcritic_forward.1} parent=1 // pred_check
      _
    $region27: #{pcritic_forward.1} parent=1 // pred_check_branch
      %48 = sbr.rel (0) target = $region29
    $region28: #{pcritic_forward.1} parent=1 // pred_region
      %50 = dma.done [#allocation3], 3072
    $region29: #{pcritic_forward.1} parent=1 // pred_fallthru
      _
    // Predicated region
    $region30: #{pcritic_forward.1} parent=1 // pred_check
      _
    $region31: #{pcritic_forward.1} parent=1 // pred_check_branch
      %52 = sbr.rel (0) target = $region33
    $region32: #{pcritic_forward.1} parent=1 // pred_region
      %54 = dma.done [#allocation5], 1024
    $region33: #{pcritic_forward.1} parent=1 // pred_fallthru
      _
    %v55 = vld [vmem:[%s0] sm:$0xff]
    %v56 = vld [vmem:[%s1] sm:$0xff]
    %v57 = vld [vmem:[#allocation2] sm:$0xff]
    %v58 = vld [vmem:[#allocation2 + $0x8] sm:$0xff]
    %v59 = vld [vmem:[#allocation2 + $0x10] sm:$0xff]
    %v60 = vld [vmem:[#allocation2 + $0x18] sm:$0xff]
    %v61 = vld [vmem:[#allocation2 + $0x20] sm:$0xff]
    %v62 = vld [vmem:[#allocation2 + $0x28] sm:$0xff]
    %v63 = vld [vmem:[#allocation2 + $0x30] sm:$0xff]
    %v64 = vld [vmem:[#allocation2 + $0x38] sm:$0xff]
    %v65 = vld [vmem:[#allocation2 + $0x40] sm:$0xff]
    %v66 = vld [vmem:[#allocation2 + $0x48] sm:$0xff]
    %v67 = vld [vmem:[#allocation2 + $0x50] sm:$0xff]
    %v68 = vld [vmem:[#allocation2 + $0x58] sm:$0xff]
    %v69 = vld [vmem:[#allocation2 + $0x60] sm:$0xff]
    %v70 = vld [vmem:[#allocation2 + $0x68] sm:$0xff]
    %v71 = vld [vmem:[#allocation2 + $0x70] sm:$0xff]
    %v72 = vld [vmem:[#allocation2 + $0x78] sm:$0xff]
    %v73 = vld [vmem:[#allocation2 + $0x80] sm:$0xff]
    %v74 = vld [vmem:[#allocation2 + $0x88] sm:$0xff]
    %v75 = vld [vmem:[#allocation2 + $0x90] sm:$0xff]
    %v76 = vld [vmem:[#allocation2 + $0x98] sm:$0xff]
    %v77 = vld [vmem:[#allocation2 + $0xa0] sm:$0xff]
    %v78 = vld [vmem:[#allocation2 + $0xa8] sm:$0xff]
    %v79 = vld [vmem:[#allocation2 + $0xb0] sm:$0xff]
    %v80 = vld [vmem:[#allocation2 + $0xb8] sm:$0xff]
    %v81 = vld [vmem:[%s3] sm:$0x3]
    %v83 = vperm.slane %v81, 0
    %v84 = vperm.slane %v81, 1
    %vm87 = vcmask 785408
    %v89 = vsel %vm87, %v55, 0
    %91 = vmatpush.msra.mxu0 0.0
    %92 = vmatpush.msra.mxu0 0.0
    %93 = vmatpush.msra.mxu0 0.0
    %94 = vmatpush.msra.mxu0 0.0
    %95 = vmatpush.msra.mxu0 %v79
    %96 = vmatpush.msra.mxu0 %v77
    %97 = vmatpush.msra.mxu0 %v75
    %98 = vmatpush.msra.mxu0 %v73
    %99 = vmatpush.msra.mxu0 %v71
    %100 = vmatpush.msra.mxu0 %v69
    %101 = vmatpush.msra.mxu0 %v67
    %102 = vmatpush.msra.mxu0 %v65
    %103 = vmatpush.msra.mxu0 %v63
    %104 = vmatpush.msra.mxu0 %v61
    %105 = vmatpush.msra.mxu0 %v59
    %106 = vmatpush.msra.mxu0 %v57
    %107 = vmatmul.f32.gmra.mxu0 %v89
    %v108 = vpop.f32.mrf.mxu0
    %v109 = vadd.f32 %v83, %v108
    %110 = vdwg.mxu0
    %111 = vmatpush.msra.mxu0 0.0
    %112 = vmatpush.msra.mxu0 0.0
    %113 = vmatpush.msra.mxu0 0.0
    %114 = vmatpush.msra.mxu0 0.0
    %115 = vmatpush.msra.mxu0 %v80
    %116 = vmatpush.msra.mxu0 %v78
    %117 = vmatpush.msra.mxu0 %v76
    %118 = vmatpush.msra.mxu0 %v74
    %119 = vmatpush.msra.mxu0 %v72
    %120 = vmatpush.msra.mxu0 %v70
    %121 = vmatpush.msra.mxu0 %v68
    %122 = vmatpush.msra.mxu0 %v66
    %123 = vmatpush.msra.mxu0 %v64
    %124 = vmatpush.msra.mxu0 %v62
    %125 = vmatpush.msra.mxu0 %v60
    %126 = vmatpush.msra.mxu0 %v58
    %127 = vmatmul.f32.gmra.mxu0 %v89
    %v128 = vpop.f32.mrf.mxu0
    %v129 = vadd.f32 %v84, %v128
    %130 = vdwg.mxu0
    %v131 = vxor.u32 %v109, 2147483648
    %v132 = vmul.f32 %v131, 1.442695
    %v133 = vpow.pop %v132
    %v134 = vadd.f32 %v133, 1.0
    %v135 = vrcp.pop %v134
    %v136 = vmul.f32 %v134, %v135
    %v137 = vsub.f32 1.0, %v136
    %v138 = vmul.f32 %v135, %v137
    %v139 = vadd.f32 %v135, %v138
    %vm140 = vweird.f32 %v134
    %vm141 = vweird.f32 %v135
    %vm142 = vmor %vm140, %vm141
    %v143 = vsel %vm142, %v135, %v139
    %v144 = vand.u32 2147483647, %v134
    %vm145 = vcmp.eq.f32.partialorder %v144, 8.507059e+37
    %v146 = vand.u32 %v134, 2147483648
    %v147 = vor.u32 1.1754944e-38, %v146
    %v148 = vsel %vm145, %v147, %v143
    %v149 = vmul.f32 1.0, %v148
    %v150 = vtanh.pop %v129
    %v151 = vxor.u32 %v129, 2147483648
    %v152 = vmul.f32 %v151, 1.442695
    %v153 = vpow.pop %v152
    %v154 = vadd.f32 %v153, 1.0
    %v155 = vrcp.pop %v154
    %v156 = vmul.f32 %v154, %v155
    %v157 = vsub.f32 1.0, %v156
    %v158 = vmul.f32 %v155, %v157
    %v159 = vadd.f32 %v155, %v158
    %vm160 = vweird.f32 %v154
    %vm161 = vweird.f32 %v155
    %vm162 = vmor %vm160, %vm161
    %v163 = vsel %vm162, %v155, %v159
    %v164 = vand.u32 2147483647, %v154
    %vm165 = vcmp.eq.f32.partialorder %v164, 8.507059e+37
    %v166 = vand.u32 %v154, 2147483648
    %v167 = vor.u32 1.1754944e-38, %v166
    %v168 = vsel %vm165, %v167, %v163
    %v169 = vmul.f32 1.0, %v168
    %171 = vrot.lane.b32.xlu0 %v56, 64
    %v172 = vpop.permute.xlu0 %171
    %v174 = vmul.f32 %v149, %v172
    %v175 = vmul.f32 %v149, %v150
    %177 = vrot.lane.b32.xlu0 %v175, 64
    %v178 = vpop.permute.xlu0 %177
    %v180 = vadd.f32 %v174, %v178
    %v181 = vtanh.pop %v180
    %v182 = vmul.f32 %v169, %v181
    %v183 = vld [vmem:[#allocation4] sm:$0xff]
    %v184 = vld [vmem:[#allocation4 + $0x8] sm:$0xff]
    %v185 = vld [vmem:[#allocation4 + $0x10] sm:$0xff]
    %v186 = vld [vmem:[#allocation4 + $0x18] sm:$0xff]
    %v187 = vld [vmem:[#allocation4 + $0x20] sm:$0xff]
    %v188 = vld [vmem:[#allocation4 + $0x28] sm:$0xff]
    %v189 = vld [vmem:[#allocation4 + $0x30] sm:$0xff]
    %v190 = vld [vmem:[#allocation4 + $0x38] sm:$0xff]
    %v191 = vld [vmem:[%s5] sm:$0x1]
    %v193 = vperm.slane %v191, 0
    %196 = vrot.lane.b32.xlu0 %v182, 64
    %v197 = vpop.permute.xlu0 %196
    %vm198 = vcmask 523264
    %v199 = vsel %vm198, %v197, 0
    %201 = vmatpush.msra.mxu0 0.0
    %202 = vmatpush.msra.mxu0 0.0
    %203 = vmatpush.msra.mxu0 0.0
    %204 = vmatpush.msra.mxu0 0.0
    %205 = vmatpush.msra.mxu0 0.0
    %206 = vmatpush.msra.mxu0 0.0
    %207 = vmatpush.msra.mxu0 0.0
    %208 = vmatpush.msra.mxu0 0.0
    %209 = vmatpush.msra.mxu0 %v190
    %210 = vmatpush.msra.mxu0 %v189
    %211 = vmatpush.msra.mxu0 %v188
    %212 = vmatpush.msra.mxu0 %v187
    %213 = vmatpush.msra.mxu0 %v186
    %214 = vmatpush.msra.mxu0 %v185
    %215 = vmatpush.msra.mxu0 %v184
    %216 = vmatpush.msra.mxu0 %v183
    %217 = vmatmul.f32.gmra.mxu0 %v199
    %v218 = vpop.f32.mrf.mxu0
    %v219 = vadd.f32 %v193, %v218
    %220 = vdwg.mxu0
    %v221 = vtanh.pop %v219
    %222 = vst [vmem:[%s6] sm:$0xff] %v221
    %224 = vst.msk [vmem:[%s6 + $0x8] sm:$0xff] %vm198, %v197
    %vm225 = vcmask 1048064
    %226 = vst.msk [vmem:[%s6 + $0x8] sm:$0xff] %vm225, %v180
    // Predicated region
    $region34: #{pcritic_forward.1} parent=1 // pred_check
      _
    $region35: #{pcritic_forward.1} parent=1 // pred_check_branch
      %228 = sbr.rel (0) target = $region37
    $region36: #{pcritic_forward.1} parent=1 // pred_region
      _
    $region37: #{pcritic_forward.1} parent=1 // pred_fallthru
      _
    // Predicated region
    $region38: #{pcritic_forward.1} parent=1 // pred_check
      _
    $region39: #{pcritic_forward.1} parent=1 // pred_check_branch
      %230 = sbr.rel (0) target = $region41
    $region40: #{pcritic_forward.1} parent=1 // pred_region
      _
    $region41: #{pcritic_forward.1} parent=1 // pred_fallthru
      _
    %231 = vsyncpa [#allocation3], 1
    %232 = vsyncpa [#allocation5], 1

</llo_original>
